<compile_context>
chip_gen: v7x
topology: tpu7x:2x2x1
jax: 0.10.0
libtpu: 0.0.40
codegen_flags: <defaults>
</compile_context>

<pallas_src>
import jax
import jax.numpy as jnp
from jax.experimental import pallas as pl
from jax.experimental.pallas import tpu as pltpu


def _round_up(x, m):
    return ((x + m - 1) // m) * m


def _matmul_add_kernel(a_ref, b_ref, add_ref, o_ref, acc_ref):
    # a_ref:   (tm, tk) bf16  -- patch rows (flattened over batch*patches)
    # b_ref:   (tk, tn) bf16  -- flattened conv weight
    # add_ref: (tm, tn) f32   -- conv bias + position embedding per row
    # o_ref:   (tm, tn) f32
    # acc_ref: (tm, tn) f32 VMEM accumulator scratch
    k = pl.program_id(2)

    @pl.when(k == 0)
    def _():
        acc_ref[...] = jnp.zeros_like(acc_ref)

    acc_ref[...] += jnp.dot(a_ref[...], b_ref[...],
                            preferred_element_type=jnp.float32)

    @pl.when(k == pl.num_programs(2) - 1)
    def _():
        # Fused epilogue: add bias+pos onto the f32 accumulator, store lane-dense.
        o_ref[...] = (acc_ref[...] + add_ref[...]).astype(o_ref.dtype)


def embeddings_forward(x, conv_w, conv_b, cls_token, pos_emb, patch_size,
                       *, tm=128, tn=128, tk=128):
    """x: (B, C, H, W) float32. Returns (B, n_patches + 1, hidden) float32."""
    B, C, H, W = x.shape
    ph, pw = patch_size
    gh, gw = H // ph, W // pw
    n_patches = gh * gw
    hidden = conv_w.shape[0]
    P = C * ph * pw
    M = B * n_patches

    # --- glue: patchify (== Conv2d with stride == kernel_size) + bf16 cast ---
    # (B, C, gh, ph, gw, pw) -> (B, gh, gw, C, ph, pw) -> (M, P)
    # TODO(synk): fold this transpose into strided in-kernel DMA loads so the
    # re-laid-out activation is never materialized in HBM.
    patches = x.reshape(B, C, gh, ph, gw, pw)
    patches = patches.transpose(0, 2, 4, 1, 3, 5).reshape(M, P)
    patches = patches.astype(jnp.bfloat16)

    # Conv weight flattened to (P, hidden), bf16 (K ordering = (C, ph, pw)).
    w_flat = conv_w.reshape(hidden, P).T.astype(jnp.bfloat16)

    # Batch-independent epilogue addend: conv bias + position embedding rows 1..
    # (the cls row 0 is handled outside the kernel). Kept in f32 for accuracy.
    pos_rest = pos_emb.reshape(n_patches + 1, hidden)[1:]            # (n_patches, hidden)
    addend = (pos_rest + conv_b.reshape(1, hidden)).astype(jnp.float32)
    addend = jnp.broadcast_to(addend[None], (B, n_patches, hidden)).reshape(M, hidden)

    # --- pad M / K / N up to MXU / lane-aligned 128 tiles ---
    M_pad = _round_up(M, tm)
    K_pad = _round_up(P, tk)
    N_pad = _round_up(hidden, tn)
    patches = jnp.pad(patches, ((0, M_pad - M), (0, K_pad - P)))
    w_flat = jnp.pad(w_flat, ((0, K_pad - P), (0, N_pad - hidden)))
    addend = jnp.pad(addend, ((0, M_pad - M), (0, N_pad - hidden)))

    grid = (M_pad // tm, N_pad // tn, K_pad // tk)

    out = pl.pallas_call(
        _matmul_add_kernel,
        out_shape=jax.ShapeDtypeStruct((M_pad, N_pad), jnp.float32),
        grid_spec=pltpu.PrefetchScalarGridSpec(
            num_scalar_prefetch=0,
            grid=grid,
            in_specs=[
                pl.BlockSpec((tm, tk), lambda i, j, k: (i, k)),
                pl.BlockSpec((tk, tn), lambda i, j, k: (k, j)),
                pl.BlockSpec((tm, tn), lambda i, j, k: (i, j)),
            ],
            out_specs=pl.BlockSpec((tm, tn), lambda i, j, k: (i, j)),
            scratch_shapes=[pltpu.VMEM((tm, tn), jnp.float32)],
        ),
        compiler_params=pltpu.CompilerParams(
            dimension_semantics=("parallel", "parallel", "arbitrary")),
    )(patches, w_flat, addend)

    body = out[:M, :hidden].reshape(B, n_patches, hidden)

    # cls row (batch independent): cls_token + pos_emb[0], broadcast across B.
    row0 = cls_token.reshape(1, 1, hidden) + pos_emb.reshape(1, n_patches + 1, hidden)[:, :1]
    row0 = jnp.broadcast_to(row0, (B, 1, hidden))

    # Dropout: eval-mode identity.
    return jnp.concatenate([row0, body], axis=1)


def _reference(x, conv_w, conv_b, cls_token, pos_emb, patch_size):
    """Pure-JAX reference matching the PyTorch forward (eval-mode dropout)."""
    ph, pw = patch_size
    y = jax.lax.conv_general_dilated(
        x, conv_w, window_strides=(ph, pw), padding="VALID",
        dimension_numbers=("NCHW", "OIHW", "NCHW"))
    y = y + conv_b.reshape(1, -1, 1, 1)
    B_, hid, gh, gw = y.shape
    y = y.reshape(B_, hid, gh * gw).transpose(0, 2, 1)            # (B, n_patches, hid)
    cls = jnp.broadcast_to(cls_token.reshape(1, 1, hid), (B_, 1, hid))
    y = jnp.concatenate([cls, y], axis=1)
    return y + pos_emb


if __name__ == "__main__":
    # Small config consistent with the module: img 16x16, patches 4x4,
    # in_channels=3, hidden_size=32 -> n_patches = 16, seq = 17.
    B, C, H, W = 2, 3, 16, 16
    patch_size = (4, 4)
    hidden = 32
    n_patches = (H // patch_size[0]) * (W // patch_size[1])

    key = jax.random.PRNGKey(0)
    kx, kw, kb, kc, kp = jax.random.split(key, 5)

    x = jax.random.normal(kx, (B, C, H, W), dtype=jnp.float32)
    conv_w = jax.random.normal(kw, (hidden, C, *patch_size), dtype=jnp.float32) * 0.02
    conv_b = jax.random.normal(kb, (hidden,), dtype=jnp.float32) * 0.02
    # cls_token / position_embeddings (zeros in the module; random here so the
    # adds are exercised — still deterministic).
    cls_token = jax.random.normal(kc, (1, 1, hidden), dtype=jnp.float32) * 0.02
    pos_emb = jax.random.normal(kp, (1, n_patches + 1, hidden), dtype=jnp.float32) * 0.02

    out = embeddings_forward(x, conv_w, conv_b, cls_token, pos_emb, patch_size)
    out = jax.block_until_ready(out)

    ref = _reference(x, conv_w, conv_b, cls_token, pos_emb, patch_size)
    assert out.shape == (B, n_patches + 1, hidden), out.shape
    # bf16 matmul inputs with f32 accumulation -> loosened tolerance.
    assert jnp.allclose(out, ref, atol=2e-2, rtol=2e-2), float(jnp.abs(out - ref).max())

    print("KERNEL_OK")
</pallas_src>

<mosaic_0001>
module attributes {stable_mosaic.version = 11 : i64} {
  func.func @_matmul_add_kernel(%arg0: i32, %arg1: i32, %arg2: i32, %arg3: memref<128x128xbf16, #tpu.memory_space<vmem>>, %arg4: memref<128x128xbf16, #tpu.memory_space<vmem>>, %arg5: memref<128x128xf32, #tpu.memory_space<vmem>>, %arg6: memref<128x128xf32, #tpu.memory_space<vmem>>, %arg7: memref<128x128xf32, #tpu.memory_space<vmem>>) attributes {dimension_semantics = [#tpu.dimension_semantics<parallel>, #tpu.dimension_semantics<parallel>, #tpu.dimension_semantics<arbitrary>], iteration_bounds = array<i64: 1, 1, 1>, scalar_prefetch = 0 : i64, scratch_operands = 1 : i64, tpu.core_type = #tpu.core_type<tc>, window_params = [{transform_indices = @transform_0, window_bounds = array<i64: 128, 128>}, {transform_indices = @transform_1, window_bounds = array<i64: 128, 128>}, {transform_indices = @transform_2, window_bounds = array<i64: 128, 128>}, {transform_indices = @transform_3, window_bounds = array<i64: 128, 128>}]} {
    %c0_i32 = arith.constant 0 : i32
    %0 = arith.cmpi eq, %arg2, %c0_i32 : i32
    %1 = arith.extui %0 : i1 to i32
    %c0_i32_0 = arith.constant 0 : i32
    %2 = arith.cmpi ne, %1, %c0_i32_0 : i32
    scf.if %2 {
      %cst_10 = arith.constant 0.000000e+00 : f32
      %12 = vector.broadcast %cst_10 : f32 to vector<128x128xf32>
      %c0_11 = arith.constant 0 : index
      %c0_12 = arith.constant 0 : index
      %13 = vector.load %arg7[%c0_11, %c0_12] : memref<128x128xf32, #tpu.memory_space<vmem>>, vector<128x128xf32>
      tpu.vector_store %arg7[%c0_11, %c0_12], %12 {strides = array<i32>} : memref<128x128xf32, #tpu.memory_space<vmem>>, vector<128x128xf32>,
    } else {
    }
    %c0 = arith.constant 0 : index
    %c0_1 = arith.constant 0 : index
    %3 = vector.load %arg7[%c0, %c0_1] : memref<128x128xf32, #tpu.memory_space<vmem>>, vector<128x128xf32>
    %c0_2 = arith.constant 0 : index
    %c0_3 = arith.constant 0 : index
    %4 = vector.load %arg3[%c0_2, %c0_3] : memref<128x128xbf16, #tpu.memory_space<vmem>>, vector<128x128xbf16>
    %c0_4 = arith.constant 0 : index
    %c0_5 = arith.constant 0 : index
    %5 = vector.load %arg4[%c0_4, %c0_5] : memref<128x128xbf16, #tpu.memory_space<vmem>>, vector<128x128xbf16>
    %cst = arith.constant dense<0.000000e+00> : vector<128x128xf32>
    %6 = tpu.matmul %4, %5, %cst {dimension_numbers = #tpu.dot_dimension_numbers<[1], [0], [0], [1], [0, 0, 1, 1], [], []>} : vector<128x128xbf16>, vector<128x128xbf16>, vector<128x128xf32> -> vector<128x128xf32>
    %7 = arith.addf %3, %6 : vector<128x128xf32>
    %c0_6 = arith.constant 0 : index
    %c0_7 = arith.constant 0 : index
    %8 = vector.load %arg7[%c0_6, %c0_7] : memref<128x128xf32, #tpu.memory_space<vmem>>, vector<128x128xf32>
    tpu.vector_store %arg7[%c0_6, %c0_7], %7 {strides = array<i32>} : memref<128x128xf32, #tpu.memory_space<vmem>>, vector<128x128xf32>,
    %c0_i32_8 = arith.constant 0 : i32
    %9 = arith.cmpi eq, %arg2, %c0_i32_8 : i32
    %10 = arith.extui %9 : i1 to i32
    %c0_i32_9 = arith.constant 0 : i32
    %11 = arith.cmpi ne, %10, %c0_i32_9 : i32
    scf.if %11 {
      %c0_10 = arith.constant 0 : index
      %c0_11 = arith.constant 0 : index
      %12 = vector.load %arg7[%c0_10, %c0_11] : memref<128x128xf32, #tpu.memory_space<vmem>>, vector<128x128xf32>
      %c0_12 = arith.constant 0 : index
      %c0_13 = arith.constant 0 : index
      %13 = vector.load %arg5[%c0_12, %c0_13] : memref<128x128xf32, #tpu.memory_space<vmem>>, vector<128x128xf32>
      %14 = arith.addf %12, %13 : vector<128x128xf32>
      %c0_14 = arith.constant 0 : index
      %c0_15 = arith.constant 0 : index
      %15 = vector.load %arg6[%c0_14, %c0_15] : memref<128x128xf32, #tpu.memory_space<vmem>>, vector<128x128xf32>
      tpu.vector_store %arg6[%c0_14, %c0_15], %14 {strides = array<i32>} : memref<128x128xf32, #tpu.memory_space<vmem>>, vector<128x128xf32>,
    } else {
    }
    return
  }
  func.func @transform_0(%arg0: i32, %arg1: i32, %arg2: i32) -> (i32, i32) {
    %c0_i32 = arith.constant 0 : i32
    return %arg0, %arg2 : i32, i32
  }
  func.func @transform_1(%arg0: i32, %arg1: i32, %arg2: i32) -> (i32, i32) {
    %c0_i32 = arith.constant 0 : i32
    return %arg2, %arg1 : i32, i32
  }
  func.func @transform_2(%arg0: i32, %arg1: i32, %arg2: i32) -> (i32, i32) {
    %c0_i32 = arith.constant 0 : i32
    return %arg0, %arg1 : i32, i32
  }
  func.func @transform_3(%arg0: i32, %arg1: i32, %arg2: i32) -> (i32, i32) {
    %c0_i32 = arith.constant 0 : i32
    return %arg0, %arg1 : i32, i32
  }
}

</mosaic_0001>

<llo_original>
// kernel: tpu_custom_call.1
$region0: #{tpu_custom_call.1}
  #allocation0 [shape = 'u32[]', space=smem, size = 0x4, offset = 0x4, fixed_abs, tag = 'smem constant byte address 0x4 - core index']
  #allocation1 [shape = 'u32[144,128]{1,0:T(1,128)}', space=vmem, size = 0x12000, scoped, tag = 'internal scratch']
  #allocation2 [shape = 'f32[128,128]{1,0:T(8,128)}', space=vmem, size = 0x10000, scoped, tag = 'scratch operand']
  %s0 = inlined_call_operand.hbm [shape: bf16[128,128], index: 0, kind: input, shape index: {}]
  %s1 = inlined_call_operand.hbm [shape: bf16[128,128], index: 1, kind: input, shape index: {}]
  %s2 = inlined_call_operand.hbm [shape: f32[128,128], index: 2, kind: input, shape index: {}]
  %s3 = inlined_call_operand.hbm [shape: f32[128,128], index: 3, kind: output, shape index: {}]
  %s4 = sld [smem:[#allocation0]]
  $region42: #{tpu_custom_call.1} parent=0
    _
  %s6 = ssub.s32 1, %s4
  %s7 = scalar_select 0, %s6, %s4
  $region1: #{tpu_custom_call.1} parent=0
    #allocation3 [shape = 'u8[32768]{0}', space=vmem, size = 0x8000, scoped, tag = 'input window, operand 0, single buffered']
    #allocation4 [shape = 's32[1]{0}', space=sflag, size = 0x4, scoped, tag = 'scoped memory for tpu_custom_call.1']
    #allocation5 [shape = 's32[1]{0}', space=sflag, size = 0x4, scoped, tag = 'scoped memory for tpu_custom_call.1']
    #allocation6 [shape = 'u8[32768]{0}', space=vmem, size = 0x8000, scoped, tag = 'input window, operand 1, single buffered']
    #allocation7 [shape = 's32[1]{0}', space=sflag, size = 0x4, scoped, tag = 'scoped memory for tpu_custom_call.1']
    #allocation8 [shape = 'u8[65536]{0}', space=vmem, size = 0x10000, scoped, tag = 'input window, operand 2, single buffered']
    #allocation9 [shape = 'u8[65536]{0}', space=vmem, size = 0x10000, scoped, tag = 'output window, operand 0, single buffered']
    %8 = vsyncpa [#allocation4], 0
    %9 = vsyncpa [#allocation7], 0
    %10 = vsyncpa [#allocation5], 0
    // Predicated region
    $region2: #{tpu_custom_call.1} parent=1 // pred_check
      _
    $region3: #{tpu_custom_call.1} parent=1 // pred_check_branch
      %12 = sbr.rel (0) target = $region5
    $region4: #{tpu_custom_call.1} parent=1 // pred_region
      %s14 = ssub.s32 1024, 1024
      %15 = vsyncadd [#allocation4], %s14
      %s16 = sshll.u32 [#allocation3], 4
      %s17 = int_to_ptr.vmem [resolvable:$true] %s16
      %22 = dma.hbm_to_vmem [thread:$0]  %s0, 1024, %s17, [#allocation4], 64, 64, 4
    $region5: #{tpu_custom_call.1} parent=1 // pred_fallthru
      _
    // Predicated region
    $region6: #{tpu_custom_call.1} parent=1 // pred_check
      _
    $region7: #{tpu_custom_call.1} parent=1 // pred_check_branch
      %24 = sbr.rel (0) target = $region9
    $region8: #{tpu_custom_call.1} parent=1 // pred_region
      %s26 = ssub.s32 1024, 1024
      %27 = vsyncadd [#allocation7], %s26
      %s28 = sshll.u32 [#allocation6], 4
      %s29 = int_to_ptr.vmem [resolvable:$true] %s28
      %34 = dma.hbm_to_vmem [thread:$0]  %s1, 1024, %s29, [#allocation7], 64, 64, 4
    $region9: #{tpu_custom_call.1} parent=1 // pred_fallthru
      _
    // Predicated region
    $region10: #{tpu_custom_call.1} parent=1 // pred_check
      _
    $region11: #{tpu_custom_call.1} parent=1 // pred_check_branch
      %36 = sbr.rel (0) target = $region13
    $region12: #{tpu_custom_call.1} parent=1 // pred_region
      %s38 = ssub.s32 2048, 2048
      %39 = vsyncadd [#allocation7], %s38
      %s40 = sshll.u32 [#allocation8], 4
      %s41 = int_to_ptr.vmem [resolvable:$true] %s40
      %46 = dma.hbm_to_vmem [thread:$0]  %s2, 2048, %s41, [#allocation7], 128, 128, 8
    $region13: #{tpu_custom_call.1} parent=1 // pred_fallthru
      _
    // Predicated region
    $region14: #{tpu_custom_call.1} parent=1 // pred_check
      _
    $region15: #{tpu_custom_call.1} parent=1 // pred_check_branch
      %48 = sbr.rel (0) target = $region17
    $region16: #{tpu_custom_call.1} parent=1 // pred_region
      %49 = dma.done [#allocation4], 1024
    $region17: #{tpu_custom_call.1} parent=1 // pred_fallthru
      _
    // Predicated region
    $region18: #{tpu_custom_call.1} parent=1 // pred_check
      _
    $region19: #{tpu_custom_call.1} parent=1 // pred_check_branch
      %51 = sbr.rel (0) target = $region21
    $region20: #{tpu_custom_call.1} parent=1 // pred_region
      %52 = dma.done [#allocation7], 1024
    $region21: #{tpu_custom_call.1} parent=1 // pred_fallthru
      _
    // Predicated region
    $region22: #{tpu_custom_call.1} parent=1 // pred_check
      _
    $region23: #{tpu_custom_call.1} parent=1 // pred_check_branch
      %54 = sbr.rel (0) target = $region25
    $region24: #{tpu_custom_call.1} parent=1 // pred_region
      %55 = dma.done [#allocation7], 2048
    $region25: #{tpu_custom_call.1} parent=1 // pred_fallthru
      _
    %p57 = scmp.eq.s32.totalorder 0, 0
    // Predicated region
    $region26: #{tpu_custom_call.1} parent=1 // pred_check
      %p58 = pneg %p57
    $region27: #{tpu_custom_call.1} parent=1 // pred_check_branch
      %60 = sbr.rel (%p58) target = $region29
    $region28: #{tpu_custom_call.1} parent=1 // pred_region
      %61 = vst [vmem:[#allocation2] sm:$0xff] 0.0
      %62 = vst [vmem:[#allocation2 + $0x8] sm:$0xff] 0.0
      %63 = vst [vmem:[#allocation2 + $0x10] sm:$0xff] 0.0
      %64 = vst [vmem:[#allocation2 + $0x18] sm:$0xff] 0.0
      %65 = vst [vmem:[#allocation2 + $0x20] sm:$0xff] 0.0
      %66 = vst [vmem:[#allocation2 + $0x28] sm:$0xff] 0.0
      %67 = vst [vmem:[#allocation2 + $0x30] sm:$0xff] 0.0
      %68 = vst [vmem:[#allocation2 + $0x38] sm:$0xff] 0.0
      %69 = vst [vmem:[#allocation2 + $0x40] sm:$0xff] 0.0
      %70 = vst [vmem:[#allocation2 + $0x48] sm:$0xff] 0.0
      %71 = vst [vmem:[#allocation2 + $0x50] sm:$0xff] 0.0
      %72 = vst [vmem:[#allocation2 + $0x58] sm:$0xff] 0.0
      %73 = vst [vmem:[#allocation2 + $0x60] sm:$0xff] 0.0
      %74 = vst [vmem:[#allocation2 + $0x68] sm:$0xff] 0.0
      %75 = vst [vmem:[#allocation2 + $0x70] sm:$0xff] 0.0
      %76 = vst [vmem:[#allocation2 + $0x78] sm:$0xff] 0.0
    $region29: #{tpu_custom_call.1} parent=1 // pred_fallthru
      _
    %v77 = vld [vmem:[#allocation2] sm:$0xff]
    %v78 = vld [vmem:[#allocation2 + $0x8] sm:$0xff]
    %v79 = vld [vmem:[#allocation2 + $0x10] sm:$0xff]
    %v80 = vld [vmem:[#allocation2 + $0x18] sm:$0xff]
    %v81 = vld [vmem:[#allocation2 + $0x20] sm:$0xff]
    %v82 = vld [vmem:[#allocation2 + $0x28] sm:$0xff]
    %v83 = vld [vmem:[#allocation2 + $0x30] sm:$0xff]
    %v84 = vld [vmem:[#allocation2 + $0x38] sm:$0xff]
    %v85 = vld [vmem:[#allocation2 + $0x40] sm:$0xff]
    %v86 = vld [vmem:[#allocation2 + $0x48] sm:$0xff]
    %v87 = vld [vmem:[#allocation2 + $0x50] sm:$0xff]
    %v88 = vld [vmem:[#allocation2 + $0x58] sm:$0xff]
    %v89 = vld [vmem:[#allocation2 + $0x60] sm:$0xff]
    %v90 = vld [vmem:[#allocation2 + $0x68] sm:$0xff]
    %v91 = vld [vmem:[#allocation2 + $0x70] sm:$0xff]
    %v92 = vld [vmem:[#allocation2 + $0x78] sm:$0xff]
    %v93 = vld [vmem:[#allocation3] sm:$0xf]
    %v94 = vld [vmem:[#allocation3 + $0x4] sm:$0xf]
    %v95 = vld [vmem:[#allocation3 + $0x8] sm:$0xf]
    %v96 = vld [vmem:[#allocation3 + $0xc] sm:$0xf]
    %v97 = vld [vmem:[#allocation3 + $0x10] sm:$0xf]
    %v98 = vld [vmem:[#allocation3 + $0x14] sm:$0xf]
    %v99 = vld [vmem:[#allocation3 + $0x18] sm:$0xf]
    %v100 = vld [vmem:[#allocation3 + $0x1c] sm:$0xf]
    %v101 = vld [vmem:[#allocation3 + $0x20] sm:$0xf]
    %v102 = vld [vmem:[#allocation3 + $0x24] sm:$0xf]
    %v103 = vld [vmem:[#allocation3 + $0x28] sm:$0xf]
    %v104 = vld [vmem:[#allocation3 + $0x2c] sm:$0xf]
    %v105 = vld [vmem:[#allocation3 + $0x30] sm:$0xf]
    %v106 = vld [vmem:[#allocation3 + $0x34] sm:$0xf]
    %v107 = vld [vmem:[#allocation3 + $0x38] sm:$0xf]
    %v108 = vld [vmem:[#allocation3 + $0x3c] sm:$0xf]
    %v109 = vld [vmem:[#allocation6] sm:$0xf]
    %v110 = vld [vmem:[#allocation6 + $0x4] sm:$0xf]
    %v111 = vld [vmem:[#allocation6 + $0x8] sm:$0xf]
    %v112 = vld [vmem:[#allocation6 + $0xc] sm:$0xf]
    %v113 = vld [vmem:[#allocation6 + $0x10] sm:$0xf]
    %v114 = vld [vmem:[#allocation6 + $0x14] sm:$0xf]
    %v115 = vld [vmem:[#allocation6 + $0x18] sm:$0xf]
    %v116 = vld [vmem:[#allocation6 + $0x1c] sm:$0xf]
    %v117 = vld [vmem:[#allocation6 + $0x20] sm:$0xf]
    %v118 = vld [vmem:[#allocation6 + $0x24] sm:$0xf]
    %v119 = vld [vmem:[#allocation6 + $0x28] sm:$0xf]
    %v120 = vld [vmem:[#allocation6 + $0x2c] sm:$0xf]
    %v121 = vld [vmem:[#allocation6 + $0x30] sm:$0xf]
    %v122 = vld [vmem:[#allocation6 + $0x34] sm:$0xf]
    %v123 = vld [vmem:[#allocation6 + $0x38] sm:$0xf]
    %v124 = vld [vmem:[#allocation6 + $0x3c] sm:$0xf]
    %v141 = vunpack.c.l.b16 %v93
    %v142 = vunpack.c.l.b16 %v94
    %v143 = vunpack.c.l.b16 %v95
    %v144 = vunpack.c.l.b16 %v96
    %v145 = vunpack.c.l.b16 %v97
    %v146 = vunpack.c.l.b16 %v98
    %v147 = vunpack.c.l.b16 %v99
    %v148 = vunpack.c.l.b16 %v100
    %v149 = vunpack.c.l.b16 %v101
    %v150 = vunpack.c.l.b16 %v102
    %v151 = vunpack.c.l.b16 %v103
    %v152 = vunpack.c.l.b16 %v104
    %v153 = vunpack.c.l.b16 %v105
    %v154 = vunpack.c.l.b16 %v106
    %v155 = vunpack.c.l.b16 %v107
    %v156 = vunpack.c.l.b16 %v108
    %v157 = vpack.c.b16 %v142, %v141
    %v158 = vpack.c.b16 %v144, %v143
    %v159 = vpack.c.b16 %v146, %v145
    %v160 = vpack.c.b16 %v148, %v147
    %v161 = vpack.c.b16 %v150, %v149
    %v162 = vpack.c.b16 %v152, %v151
    %v163 = vpack.c.b16 %v154, %v153
    %v164 = vpack.c.b16 %v156, %v155
    %v189 = vunpack.c.l.b16 %v109
    %v190 = vunpack.c.l.b16 %v110
    %v191 = vunpack.c.l.b16 %v111
    %v192 = vunpack.c.l.b16 %v112
    %v193 = vunpack.c.l.b16 %v113
    %v194 = vunpack.c.l.b16 %v114
    %v195 = vunpack.c.l.b16 %v115
    %v196 = vunpack.c.l.b16 %v116
    %v197 = vunpack.c.l.b16 %v117
    %v198 = vunpack.c.l.b16 %v118
    %v199 = vunpack.c.l.b16 %v119
    %v200 = vunpack.c.l.b16 %v120
    %v201 = vunpack.c.l.b16 %v121
    %v202 = vunpack.c.l.b16 %v122
    %v203 = vunpack.c.l.b16 %v123
    %v204 = vunpack.c.l.b16 %v124
    %v205 = vpack.c.b16 %v190, %v189
    %v206 = vpack.c.b16 %v192, %v191
    %v207 = vpack.c.b16 %v194, %v193
    %v208 = vpack.c.b16 %v196, %v195
    %v209 = vpack.c.b16 %v198, %v197
    %v210 = vpack.c.b16 %v200, %v199
    %v211 = vpack.c.b16 %v202, %v201
    %v212 = vpack.c.b16 %v204, %v203
    %221 = vmatprep.subr.bf16.mxu0 0
    %222 = vmatpush1.bf16.msra.mxu0 %v205
    %223 = vmatprep.subr.bf16.mxu0 0
    %224 = vmatpush1.bf16.msra.mxu0 %v206
    %225 = vmatprep.subr.bf16.mxu0 0
    %226 = vmatpush1.bf16.msra.mxu0 %v207
    %227 = vmatprep.subr.bf16.mxu0 0
    %228 = vmatpush1.bf16.msra.mxu0 %v208
    %229 = vmatprep.subr.bf16.mxu0 0
    %230 = vmatpush1.bf16.msra.mxu0 %v209
    %231 = vmatprep.subr.bf16.mxu0 0
    %232 = vmatpush1.bf16.msra.mxu0 %v210
    %233 = vmatprep.subr.bf16.mxu0 0
    %234 = vmatpush1.bf16.msra.mxu0 %v211
    %235 = vmatprep.subr.bf16.mxu0 0
    %236 = vmatpush1.bf16.msra.mxu0 %v212
    %237 = vmatprep.subr.bf16.mxu0 0
    %238 = vmatpush1.bf16.msra.mxu0 0
    %239 = vmatprep.subr.bf16.mxu0 0
    %240 = vmatpush1.bf16.msra.mxu0 0
    %241 = vmatprep.subr.bf16.mxu0 0
    %242 = vmatpush1.bf16.msra.mxu0 0
    %243 = vmatprep.subr.bf16.mxu0 0
    %244 = vmatpush1.bf16.msra.mxu0 0
    %245 = vmatprep.subr.bf16.mxu0 0
    %246 = vmatpush1.bf16.msra.mxu0 0
    %247 = vmatprep.subr.bf16.mxu0 0
    %248 = vmatpush1.bf16.msra.mxu0 0
    %249 = vmatprep.subr.bf16.mxu0 0
    %250 = vmatpush1.bf16.msra.mxu0 0
    %251 = vmatprep.subr.bf16.mxu0 0
    %252 = vmatpush1.bf16.msra.mxu0 0
    %253 = vmatprep.mubr.bf16.mxu0 0
    %254 = vmatmul.mubr.bf16.gmra.mrb[0].mxu0 %v157
    %v255 = vpop.f32.mrb[0].mxu0
    %v256 = vadd.f32 0.0, %v255
    %v257 = vpop.f32.mrb[0].mxu0
    %v258 = vpop.f32.mrb[0].mxu0
    %v259 = vadd.f32 0.0, %v258
    %v260 = vpop.f32.mrb[0].mxu0
    %261 = vmatprep.mubr.bf16.mxu0 0
    %262 = vmatmul.mubr.bf16.gmra.mrb[0].mxu0 %v158
    %v263 = vpop.f32.mrb[0].mxu0
    %v264 = vadd.f32 0.0, %v263
    %v265 = vpop.f32.mrb[0].mxu0
    %v266 = vpop.f32.mrb[0].mxu0
    %v267 = vadd.f32 0.0, %v266
    %v268 = vpop.f32.mrb[0].mxu0
    %269 = vmatprep.mubr.bf16.mxu0 0
    %270 = vmatmul.mubr.bf16.gmra.mrb[0].mxu0 %v159
    %v271 = vpop.f32.mrb[0].mxu0
    %v272 = vadd.f32 0.0, %v271
    %v273 = vpop.f32.mrb[0].mxu0
    %v274 = vpop.f32.mrb[0].mxu0
    %v275 = vadd.f32 0.0, %v274
    %v276 = vpop.f32.mrb[0].mxu0
    %277 = vmatprep.mubr.bf16.mxu0 0
    %278 = vmatmul.mubr.bf16.gmra.mrb[0].mxu0 %v160
    %v279 = vpop.f32.mrb[0].mxu0
    %v280 = vadd.f32 0.0, %v279
    %v281 = vpop.f32.mrb[0].mxu0
    %v282 = vpop.f32.mrb[0].mxu0
    %v283 = vadd.f32 0.0, %v282
    %v284 = vpop.f32.mrb[0].mxu0
    %285 = vmatprep.mubr.bf16.mxu0 0
    %286 = vmatmul.mubr.bf16.gmra.mrb[0].mxu0 %v161
    %v287 = vpop.f32.mrb[0].mxu0
    %v288 = vadd.f32 0.0, %v287
    %v289 = vpop.f32.mrb[0].mxu0
    %v290 = vpop.f32.mrb[0].mxu0
    %v291 = vadd.f32 0.0, %v290
    %v292 = vpop.f32.mrb[0].mxu0
    %293 = vmatprep.mubr.bf16.mxu0 0
    %294 = vmatmul.mubr.bf16.gmra.mrb[0].mxu0 %v162
    %v295 = vpop.f32.mrb[0].mxu0
    %v296 = vadd.f32 0.0, %v295
    %v297 = vpop.f32.mrb[0].mxu0
    %v298 = vpop.f32.mrb[0].mxu0
    %v299 = vadd.f32 0.0, %v298
    %v300 = vpop.f32.mrb[0].mxu0
    %301 = vmatprep.mubr.bf16.mxu0 0
    %302 = vmatmul.mubr.bf16.gmra.mrb[0].mxu0 %v163
    %v303 = vpop.f32.mrb[0].mxu0
    %v304 = vadd.f32 0.0, %v303
    %v305 = vpop.f32.mrb[0].mxu0
    %v306 = vpop.f32.mrb[0].mxu0
    %v307 = vadd.f32 0.0, %v306
    %v308 = vpop.f32.mrb[0].mxu0
    %309 = vmatprep.mubr.bf16.mxu0 0
    %310 = vmatmul.mubr.bf16.gmra.mrb[0].mxu0 %v164
    %v311 = vpop.f32.mrb[0].mxu0
    %v312 = vadd.f32 0.0, %v311
    %v313 = vpop.f32.mrb[0].mxu0
    %v314 = vpop.f32.mrb[0].mxu0
    %v315 = vadd.f32 0.0, %v314
    %v316 = vpop.f32.mrb[0].mxu0
    %317 = vdwg.mxu0
    %v318 = vadd.f32 %v77, %v256
    %v319 = vadd.f32 %v78, %v259
    %v320 = vadd.f32 %v79, %v264
    %v321 = vadd.f32 %v80, %v267
    %v322 = vadd.f32 %v81, %v272
    %v323 = vadd.f32 %v82, %v275
    %v324 = vadd.f32 %v83, %v280
    %v325 = vadd.f32 %v84, %v283
    %v326 = vadd.f32 %v85, %v288
    %v327 = vadd.f32 %v86, %v291
    %v328 = vadd.f32 %v87, %v296
    %v329 = vadd.f32 %v88, %v299
    %v330 = vadd.f32 %v89, %v304
    %v331 = vadd.f32 %v90, %v307
    %v332 = vadd.f32 %v91, %v312
    %v333 = vadd.f32 %v92, %v315
    %334 = vst [vmem:[#allocation2] sm:$0xff] %v318
    %335 = vst [vmem:[#allocation2 + $0x8] sm:$0xff] %v319
    %336 = vst [vmem:[#allocation2 + $0x10] sm:$0xff] %v320
    %337 = vst [vmem:[#allocation2 + $0x18] sm:$0xff] %v321
    %338 = vst [vmem:[#allocation2 + $0x20] sm:$0xff] %v322
    %339 = vst [vmem:[#allocation2 + $0x28] sm:$0xff] %v323
    %340 = vst [vmem:[#allocation2 + $0x30] sm:$0xff] %v324
    %341 = vst [vmem:[#allocation2 + $0x38] sm:$0xff] %v325
    %342 = vst [vmem:[#allocation2 + $0x40] sm:$0xff] %v326
    %343 = vst [vmem:[#allocation2 + $0x48] sm:$0xff] %v327
    %344 = vst [vmem:[#allocation2 + $0x50] sm:$0xff] %v328
    %345 = vst [vmem:[#allocation2 + $0x58] sm:$0xff] %v329
    %346 = vst [vmem:[#allocation2 + $0x60] sm:$0xff] %v330
    %347 = vst [vmem:[#allocation2 + $0x68] sm:$0xff] %v331
    %348 = vst [vmem:[#allocation2 + $0x70] sm:$0xff] %v332
    %349 = vst [vmem:[#allocation2 + $0x78] sm:$0xff] %v333
    // Predicated region
    $region30: #{tpu_custom_call.1} parent=1 // pred_check
      %p350 = pneg %p57
    $region31: #{tpu_custom_call.1} parent=1 // pred_check_branch
      %352 = sbr.rel (%p350) target = $region33
    $region32: #{tpu_custom_call.1} parent=1 // pred_region
      %v353 = vld [vmem:[#allocation2] sm:$0xff]
      %v354 = vld [vmem:[#allocation2 + $0x8] sm:$0xff]
      %v355 = vld [vmem:[#allocation2 + $0x10] sm:$0xff]
      %v356 = vld [vmem:[#allocation2 + $0x18] sm:$0xff]
      %v357 = vld [vmem:[#allocation2 + $0x20] sm:$0xff]
      %v358 = vld [vmem:[#allocation2 + $0x28] sm:$0xff]
      %v359 = vld [vmem:[#allocation2 + $0x30] sm:$0xff]
      %v360 = vld [vmem:[#allocation2 + $0x38] sm:$0xff]
      %v361 = vld [vmem:[#allocation2 + $0x40] sm:$0xff]
      %v362 = vld [vmem:[#allocation2 + $0x48] sm:$0xff]
      %v363 = vld [vmem:[#allocation2 + $0x50] sm:$0xff]
      %v364 = vld [vmem:[#allocation2 + $0x58] sm:$0xff]
      %v365 = vld [vmem:[#allocation2 + $0x60] sm:$0xff]
      %v366 = vld [vmem:[#allocation2 + $0x68] sm:$0xff]
      %v367 = vld [vmem:[#allocation2 + $0x70] sm:$0xff]
      %v368 = vld [vmem:[#allocation2 + $0x78] sm:$0xff]
      %v369 = vld [vmem:[#allocation8] sm:$0xff]
      %v370 = vld [vmem:[#allocation8 + $0x8] sm:$0xff]
      %v371 = vld [vmem:[#allocation8 + $0x10] sm:$0xff]
      %v372 = vld [vmem:[#allocation8 + $0x18] sm:$0xff]
      %v373 = vld [vmem:[#allocation8 + $0x20] sm:$0xff]
      %v374 = vld [vmem:[#allocation8 + $0x28] sm:$0xff]
      %v375 = vld [vmem:[#allocation8 + $0x30] sm:$0xff]
      %v376 = vld [vmem:[#allocation8 + $0x38] sm:$0xff]
      %v377 = vld [vmem:[#allocation8 + $0x40] sm:$0xff]
      %v378 = vld [vmem:[#allocation8 + $0x48] sm:$0xff]
      %v379 = vld [vmem:[#allocation8 + $0x50] sm:$0xff]
      %v380 = vld [vmem:[#allocation8 + $0x58] sm:$0xff]
      %v381 = vld [vmem:[#allocation8 + $0x60] sm:$0xff]
      %v382 = vld [vmem:[#allocation8 + $0x68] sm:$0xff]
      %v383 = vld [vmem:[#allocation8 + $0x70] sm:$0xff]
      %v384 = vld [vmem:[#allocation8 + $0x78] sm:$0xff]
      %v385 = vadd.f32 %v353, %v369
      %v386 = vadd.f32 %v354, %v370
      %v387 = vadd.f32 %v355, %v371
      %v388 = vadd.f32 %v356, %v372
      %v389 = vadd.f32 %v357, %v373
      %v390 = vadd.f32 %v358, %v374
      %v391 = vadd.f32 %v359, %v375
      %v392 = vadd.f32 %v360, %v376
      %v393 = vadd.f32 %v361, %v377
      %v394 = vadd.f32 %v362, %v378
      %v395 = vadd.f32 %v363, %v379
      %v396 = vadd.f32 %v364, %v380
      %v397 = vadd.f32 %v365, %v381
      %v398 = vadd.f32 %v366, %v382
      %v399 = vadd.f32 %v367, %v383
      %v400 = vadd.f32 %v368, %v384
      %401 = vst [vmem:[#allocation9] sm:$0xff] %v385
      %402 = vst [vmem:[#allocation9 + $0x8] sm:$0xff] %v386
      %403 = vst [vmem:[#allocation9 + $0x10] sm:$0xff] %v387
      %404 = vst [vmem:[#allocation9 + $0x18] sm:$0xff] %v388
      %405 = vst [vmem:[#allocation9 + $0x20] sm:$0xff] %v389
      %406 = vst [vmem:[#allocation9 + $0x28] sm:$0xff] %v390
      %407 = vst [vmem:[#allocation9 + $0x30] sm:$0xff] %v391
      %408 = vst [vmem:[#allocation9 + $0x38] sm:$0xff] %v392
      %409 = vst [vmem:[#allocation9 + $0x40] sm:$0xff] %v393
      %410 = vst [vmem:[#allocation9 + $0x48] sm:$0xff] %v394
      %411 = vst [vmem:[#allocation9 + $0x50] sm:$0xff] %v395
      %412 = vst [vmem:[#allocation9 + $0x58] sm:$0xff] %v396
      %413 = vst [vmem:[#allocation9 + $0x60] sm:$0xff] %v397
      %414 = vst [vmem:[#allocation9 + $0x68] sm:$0xff] %v398
      %415 = vst [vmem:[#allocation9 + $0x70] sm:$0xff] %v399
      %416 = vst [vmem:[#allocation9 + $0x78] sm:$0xff] %v400
    $region33: #{tpu_custom_call.1} parent=1 // pred_fallthru
      _
    // Predicated region
    $region34: #{tpu_custom_call.1} parent=1 // pred_check
      _
    $region35: #{tpu_custom_call.1} parent=1 // pred_check_branch
      %418 = sbr.rel (0) target = $region37
    $region36: #{tpu_custom_call.1} parent=1 // pred_region
      %s420 = ssub.s32 2048, 2048
      %421 = vsyncadd [#allocation5], %s420
      %s422 = sshll.u32 [#allocation9], 4
      %s423 = int_to_ptr.vmem [resolvable:$true] %s422
      %428 = dma.vmem_to_hbm [thread:$0]  %s423, 2048, %s3, [#allocation5], 128, 128, 8
    $region37: #{tpu_custom_call.1} parent=1 // pred_fallthru
      _
    // Predicated region
    $region38: #{tpu_custom_call.1} parent=1 // pred_check
      _
    $region39: #{tpu_custom_call.1} parent=1 // pred_check_branch
      %430 = sbr.rel (0) target = $region41
    $region40: #{tpu_custom_call.1} parent=1 // pred_region
      %431 = dma.done [#allocation5], 2048
    $region41: #{tpu_custom_call.1} parent=1 // pred_fallthru
      _
    %432 = vsyncpa [#allocation4], 1
    %433 = vsyncpa [#allocation7], 1
    %434 = vsyncpa [#allocation5], 1

</llo_original>
